<compile_context>
chip_gen: v7x
topology: tpu7x:2x2x1
jax: 0.10.0
libtpu: 0.0.40
codegen_flags: <defaults>
</compile_context>

<pallas_src>
import functools

import jax
import jax.numpy as jnp
from jax.experimental import pallas as pl
from jax.experimental.pallas import tpu as pltpu


def _bimap_kernel(x_ref, wt_ref, w_ref, o_ref):
    """x_ref: (TB*n_in, n_in), wt_ref: (n_in, n_out), w_ref: (n_out, n_in),
    o_ref: (TB, n_out, n_out)."""
    tb, n_out, _ = o_ref.shape
    n_in = wt_ref.shape[0]

    # (1) out1 = X @ W^T for the whole batch tile as ONE MXU matmul, f32 acc.
    tmp = jnp.dot(x_ref[...], wt_ref[...], preferred_element_type=jnp.float32)
    # (TB*n_in, n_out) -> (TB, n_in, n_out): splits leading (sublane) dims only,
    # lane dim untouched -> no relayout.
    tmp = tmp.reshape(tb, n_in, n_out)

    # (2) out[b] = W @ out1[b]: batched matmul over the tile.  Exact einsum
    #     semantics (no reliance on SPD symmetry).  The broadcast of W is
    #     hoisted: it happens once per kernel body, not inside any loop.
    wb = jnp.broadcast_to(w_ref[...].astype(jnp.float32), (tb, n_out, n_in))
    out = jnp.einsum('boi,bip->bop', wb, tmp,
                     preferred_element_type=jnp.float32)

    o_ref[...] = out.astype(o_ref.dtype)


def _choose_tb(B: int, n_in: int, n_out: int,
               budget_bytes: int = 12 * 1024 * 1024) -> int:
    """Pick a batch-tile size.

    Two goals: (a) each step's blocks + f32 temporaries fit a conservative
    VMEM budget (safe on v5e/v6e/v7x scoped defaults with double buffering);
    (b) blocks are big enough to sit at the HBM roofline (~4096 flattened
    rows) but not so big that large batches collapse into a single grid step
    (which would kill DMA/compute overlap and megacore sharding).
    """
    # Per-sample VMEM: 2x X block (double-buffered) + f32 intermediate +
    # broadcast W copy + 2x out block + f32 out, all counted at 4 B/elem.
    per_sample = 4 * (2 * n_in * n_in + 3 * n_in * n_out + 3 * n_out * n_out)
    max_tb = max(1, budget_bytes // max(per_sample, 1))
    target_tb = max(1, 4096 // max(n_in, 1))   # ~4096 sublane rows per step
    tb = min(B, max_tb, target_tb)
    if tb < B and n_in % 8 != 0:
        # Keep the (tb*n_in, n_in) block sublane-aligned when actually tiling.
        tb = max(8, (tb // 8) * 8)
    return max(1, min(tb, B))


@functools.partial(jax.jit, static_argnames=("tb",))
def spd_bimap(x: jnp.ndarray, weight: jnp.ndarray, tb: int | None = None) -> jnp.ndarray:
    """x: (B, n_in, n_in), weight: (n_out, n_in) -> (B, n_out, n_out)."""
    B, n_in, n_in2 = x.shape
    assert n_in == n_in2, (n_in, n_in2)
    n_out, n_in_w = weight.shape
    assert n_in_w == n_in, (n_in_w, n_in)

    if tb is None:
        tb = _choose_tb(B, n_in, n_out)
    n_blocks = -(-B // tb)          # ceil(B / tb)
    b_pad = n_blocks * tb

    if b_pad != B:
        pad = jnp.zeros((b_pad - B, n_in, n_in), dtype=x.dtype)
        x = jnp.concatenate([x, pad], axis=0)

    # Free (row-major) host-side reshape: batch flattened into the M dim.
    x2d = x.reshape(b_pad * n_in, n_in)
    wt = weight.T                   # (n_in, n_out) — transpose hoisted out of kernel
    w = weight                      # (n_out, n_in)

    flops = 2 * b_pad * (n_in * n_in * n_out + n_in * n_out * n_out)
    bytes_accessed = 4 * (b_pad * n_in * n_in + b_pad * n_out * n_out
                          + 2 * n_in * n_out)

    out = pl.pallas_call(
        _bimap_kernel,
        out_shape=jax.ShapeDtypeStruct((b_pad, n_out, n_out), x.dtype),
        grid_spec=pltpu.PrefetchScalarGridSpec(
            num_scalar_prefetch=0,
            grid=(n_blocks,),
            in_specs=[
                pl.BlockSpec((tb * n_in, n_in), lambda b: (b, 0)),   # X tile
                pl.BlockSpec((n_in, n_out), lambda b: (0, 0)),       # W^T (resident)
                pl.BlockSpec((n_out, n_in), lambda b: (0, 0)),       # W   (resident)
            ],
            out_specs=pl.BlockSpec((tb, n_out, n_out), lambda b: (b, 0, 0)),
        ),
        compiler_params=pltpu.CompilerParams(
            dimension_semantics=("parallel",),
            vmem_limit_bytes=32 * 1024 * 1024,
        ),
        cost_estimate=pl.CostEstimate(
            flops=flops, transcendentals=0, bytes_accessed=bytes_accessed),
    )(x2d, wt, w)

    return out[:B]


def make_orthogonal_weight(key, output_features: int, input_features: int) -> jnp.ndarray:
    """Deterministic analogue of nn.init.orthogonal_: rows are orthonormal."""
    a = jax.random.normal(key, (input_features, output_features), dtype=jnp.float32)
    q, r = jnp.linalg.qr(a)
    q = q * jnp.sign(jnp.diagonal(r))[None, :]
    return q.T  # (output_features, input_features)


if __name__ == "__main__":
    key = jax.random.PRNGKey(0)
    k_x, k_w = jax.random.split(key)

    B, n_in, n_out = 5, 16, 8

    # Batch of SPD matrices: A @ A^T + eps*I
    a = jax.random.normal(k_x, (B, n_in, n_in), dtype=jnp.float32)
    x = jnp.einsum('bij,bkj->bik', a, a) + 1e-3 * jnp.eye(n_in, dtype=jnp.float32)[None]
    w = make_orthogonal_weight(k_w, n_out, n_in)

    # Reference (plain JAX, same einsum chain as the PyTorch module, full f32).
    ref1 = jnp.einsum('bij,oj->bio', x, w, precision='highest')
    ref = jnp.einsum('bji,oj->boi', ref1, w, precision='highest')

    # 1) Default tile (auto-chosen; whole small batch in one grid step).
    out_a = jax.block_until_ready(spd_bimap(x, w))
    # 2) Explicit small tile: exercises multi-step grid + batch padding path.
    out_b = jax.block_until_ready(spd_bimap(x, w, tb=2))

    for out in (out_a, out_b):
        assert out.shape == (B, n_out, n_out), out.shape
        err = float(jnp.max(jnp.abs(out - ref)))
        assert jnp.allclose(out, ref, atol=1e-3, rtol=1e-3), err

    print("KERNEL_OK")
</pallas_src>

<mosaic_0001>
module attributes {stable_mosaic.version = 11 : i64} {
  func.func @_bimap_kernel(%arg0: i32, %arg1: memref<80x16xf32, #tpu.memory_space<vmem>>, %arg2: memref<16x8xf32, #tpu.memory_space<vmem>>, %arg3: memref<8x16xf32, #tpu.memory_space<vmem>>, %arg4: memref<5x8x8xf32, #tpu.memory_space<vmem>>) attributes {dimension_semantics = [#tpu.dimension_semantics<parallel>], iteration_bounds = array<i64: 1>, scalar_prefetch = 0 : i64, scratch_operands = 0 : i64, tpu.core_type = #tpu.core_type<tc>, window_params = [{transform_indices = @transform_0, window_bounds = array<i64: 80, 16>}, {pipeline_mode = #tpu.pipeline_mode<synchronous>, transform_indices = @transform_1, window_bounds = array<i64: 16, 8>}, {pipeline_mode = #tpu.pipeline_mode<synchronous>, transform_indices = @transform_2, window_bounds = array<i64: 8, 16>}, {transform_indices = @transform_3, window_bounds = array<i64: 5, 8, 8>}]} {
    %c0 = arith.constant 0 : index
    %c0_0 = arith.constant 0 : index
    %0 = vector.load %arg1[%c0, %c0_0] : memref<80x16xf32, #tpu.memory_space<vmem>>, vector<80x16xf32>
    %c0_1 = arith.constant 0 : index
    %c0_2 = arith.constant 0 : index
    %1 = vector.load %arg2[%c0_1, %c0_2] : memref<16x8xf32, #tpu.memory_space<vmem>>, vector<16x8xf32>
    %cst = arith.constant dense<0.000000e+00> : vector<80x8xf32>
    %2 = tpu.matmul %0, %1, %cst {dimension_numbers = #tpu.dot_dimension_numbers<[1], [0], [0], [1], [0, 0, 1, 1], [], []>} : vector<80x16xf32>, vector<16x8xf32>, vector<80x8xf32> -> vector<80x8xf32>
    %3 = vector.shape_cast %2 : vector<80x8xf32> to vector<5x16x8xf32>
    %c0_3 = arith.constant 0 : index
    %c0_4 = arith.constant 0 : index
    %4 = vector.load %arg3[%c0_3, %c0_4] : memref<8x16xf32, #tpu.memory_space<vmem>>, vector<8x16xf32>
    %5 = vector.shape_cast %4 : vector<8x16xf32> to vector<1x8x16xf32>
    %6 = vector.broadcast %5 : vector<1x8x16xf32> to vector<5x8x16xf32>
    "tpu.trace_start"() <{level = 10 : i32, message = "boi,bip->bop"}> : () -> ()
    %cst_5 = arith.constant dense<0.000000e+00> : vector<5x8x8xf32>
    %7 = tpu.matmul %6, %3, %cst_5 {dimension_numbers = #tpu.dot_dimension_numbers<[2], [1], [1], [2], [0, 0, 0, 1, 1, 2], [0], [0]>} : vector<5x8x16xf32>, vector<5x16x8xf32>, vector<5x8x8xf32> -> vector<5x8x8xf32>
    "tpu.trace_stop"() : () -> ()
    %c0_6 = arith.constant 0 : index
    %c0_7 = arith.constant 0 : index
    %c0_8 = arith.constant 0 : index
    %8 = vector.load %arg4[%c0_6, %c0_7, %c0_8] : memref<5x8x8xf32, #tpu.memory_space<vmem>>, vector<5x8x8xf32>
    tpu.vector_store %arg4[%c0_6, %c0_7, %c0_8], %7 {strides = array<i32>} : memref<5x8x8xf32, #tpu.memory_space<vmem>>, vector<5x8x8xf32>,
    return
  }
  func.func @transform_0(%arg0: i32) -> (i32, i32) {
    %c0_i32 = arith.constant 0 : i32
    %c0_i32_0 = arith.constant 0 : i32
    return %arg0, %c0_i32 : i32, i32
  }
  func.func @transform_1(%arg0: i32) -> (i32, i32) {
    %c0_i32 = arith.constant 0 : i32
    %c0_i32_0 = arith.constant 0 : i32
    %c0_i32_1 = arith.constant 0 : i32
    return %c0_i32, %c0_i32_0 : i32, i32
  }
  func.func @transform_2(%arg0: i32) -> (i32, i32) {
    %c0_i32 = arith.constant 0 : i32
    %c0_i32_0 = arith.constant 0 : i32
    %c0_i32_1 = arith.constant 0 : i32
    return %c0_i32, %c0_i32_0 : i32, i32
  }
  func.func @transform_3(%arg0: i32) -> (i32, i32, i32) {
    %c0_i32 = arith.constant 0 : i32
    %c0_i32_0 = arith.constant 0 : i32
    %c0_i32_1 = arith.constant 0 : i32
    return %arg0, %c0_i32, %c0_i32_0 : i32, i32, i32
  }
}

</mosaic_0001>

<llo_original>
// kernel: spd_bimap.1
$region0: #{spd_bimap.1}
  #allocation0 [shape = 'u32[]', space=smem, size = 0x4, offset = 0x4, fixed_abs, tag = 'smem constant byte address 0x4 - core index']
  #allocation1 [shape = 'u32[144,128]{1,0:T(1,128)}', space=vmem, size = 0x12000, scoped, tag = 'internal scratch']
  %s0 = inlined_call_operand.hbm [shape: f32[80,16], index: 0, kind: input, shape index: {}]
  %s1 = inlined_call_operand.vmem [shape: f32[16,8], index: 1, kind: input, shape index: {}]
  %s2 = inlined_call_operand.vmem [shape: f32[8,16], index: 2, kind: input, shape index: {}]
  %s3 = inlined_call_operand.hbm [shape: f32[5,8,8], index: 3, kind: output, shape index: {}]
  %s4 = sld [smem:[#allocation0]]
  $region26: #{spd_bimap.1} parent=0
    _
  %s6 = ssub.s32 1, %s4
  %s7 = scalar_select 0, %s6, %s4
  $region1: #{spd_bimap.1} parent=0
    #allocation2 [shape = 'u8[40960]{0}', space=vmem, size = 0xa000, scoped, tag = 'input window, operand 0, single buffered']
    #allocation3 [shape = 's32[1]{0}', space=sflag, size = 0x4, scoped, tag = 'scoped memory for spd_bimap.1']
    #allocation4 [shape = 's32[1]{0}', space=sflag, size = 0x4, scoped, tag = 'scoped memory for spd_bimap.1']
    #allocation5 [shape = 'u8[20480]{0}', space=vmem, size = 0x5000, scoped, tag = 'output window, operand 0, single buffered']
    %8 = vsyncpa [#allocation3], 0
    %9 = vsyncpa [#allocation4], 0
    // Predicated region
    $region2: #{spd_bimap.1} parent=1 // pred_check
      _
    $region3: #{spd_bimap.1} parent=1 // pred_check_branch
      %11 = sbr.rel (0) target = $region5
    $region4: #{spd_bimap.1} parent=1 // pred_region
      %s13 = ssub.s32 1280, 1280
      %14 = vsyncadd [#allocation3], %s13
      %s15 = sshll.u32 [#allocation2], 4
      %s16 = int_to_ptr.vmem [resolvable:$true] %s15
      %21 = dma.hbm_to_vmem [thread:$0]  %s0, 1280, %s16, [#allocation3], 128, 128, 8
    $region5: #{spd_bimap.1} parent=1 // pred_fallthru
      _
    // Predicated region
    $region6: #{spd_bimap.1} parent=1 // pred_check
      _
    $region7: #{spd_bimap.1} parent=1 // pred_check_branch
      %23 = sbr.rel (0) target = $region9
    $region8: #{spd_bimap.1} parent=1 // pred_region
      _
    $region9: #{spd_bimap.1} parent=1 // pred_fallthru
      _
    // Predicated region
    $region10: #{spd_bimap.1} parent=1 // pred_check
      _
    $region11: #{spd_bimap.1} parent=1 // pred_check_branch
      %25 = sbr.rel (0) target = $region13
    $region12: #{spd_bimap.1} parent=1 // pred_region
      _
    $region13: #{spd_bimap.1} parent=1 // pred_fallthru
      _
    // Predicated region
    $region14: #{spd_bimap.1} parent=1 // pred_check
      _
    $region15: #{spd_bimap.1} parent=1 // pred_check_branch
      %27 = sbr.rel (0) target = $region17
    $region16: #{spd_bimap.1} parent=1 // pred_region
      %28 = dma.done [#allocation3], 1280
    $region17: #{spd_bimap.1} parent=1 // pred_fallthru
      _
    %v29 = vld [vmem:[#allocation2] sm:$0xff]
    %v30 = vld [vmem:[#allocation2 + $0x8] sm:$0xff]
    %v31 = vld [vmem:[#allocation2 + $0x10] sm:$0xff]
    %v32 = vld [vmem:[#allocation2 + $0x18] sm:$0xff]
    %v33 = vld [vmem:[#allocation2 + $0x20] sm:$0xff]
    %v34 = vld [vmem:[#allocation2 + $0x28] sm:$0xff]
    %v35 = vld [vmem:[#allocation2 + $0x30] sm:$0xff]
    %v36 = vld [vmem:[#allocation2 + $0x38] sm:$0xff]
    %v37 = vld [vmem:[#allocation2 + $0x40] sm:$0xff]
    %v38 = vld [vmem:[#allocation2 + $0x48] sm:$0xff]
    %v39 = vld [vmem:[%s1] sm:$0xff]
    %v40 = vld [vmem:[%s1 + $0x8] sm:$0xff]
    %vm41 = vcmask 130048
    %v43 = vsel %vm41, %v29, 0
    %v46 = vsel %vm41, %v30, 0
    %v49 = vsel %vm41, %v31, 0
    %v52 = vsel %vm41, %v32, 0
    %v55 = vsel %vm41, %v33, 0
    %v58 = vsel %vm41, %v34, 0
    %v61 = vsel %vm41, %v35, 0
    %v64 = vsel %vm41, %v36, 0
    %v67 = vsel %vm41, %v37, 0
    %v70 = vsel %vm41, %v38, 0
    %72 = vmatprep.subr.mxu0 0.0
    %73 = vmatpush1.msra.mxu0 %v39
    %74 = vmatprep.subr.mxu0 0.0
    %75 = vmatpush1.msra.mxu0 %v40
    %76 = vmatprep.subr.mxu0 0.0
    %77 = vmatpush1.msra.mxu0 0.0
    %78 = vmatprep.subr.mxu0 0.0
    %79 = vmatpush1.msra.mxu0 0.0
    %80 = vmatprep.subr.mxu0 0.0
    %81 = vmatpush1.msra.mxu0 0.0
    %82 = vmatprep.subr.mxu0 0.0
    %83 = vmatpush1.msra.mxu0 0.0
    %84 = vmatprep.subr.mxu0 0.0
    %85 = vmatpush1.msra.mxu0 0.0
    %86 = vmatprep.subr.mxu0 0.0
    %87 = vmatpush1.msra.mxu0 0.0
    %88 = vmatprep.subr.mxu0 0.0
    %89 = vmatpush1.msra.mxu0 0.0
    %90 = vmatprep.subr.mxu0 0.0
    %91 = vmatpush1.msra.mxu0 0.0
    %92 = vmatprep.subr.mxu0 0.0
    %93 = vmatpush1.msra.mxu0 0.0
    %94 = vmatprep.subr.mxu0 0.0
    %95 = vmatpush1.msra.mxu0 0.0
    %96 = vmatprep.subr.mxu0 0.0
    %97 = vmatpush1.msra.mxu0 0.0
    %98 = vmatprep.subr.mxu0 0.0
    %99 = vmatpush1.msra.mxu0 0.0
    %100 = vmatprep.subr.mxu0 0.0
    %101 = vmatpush1.msra.mxu0 0.0
    %102 = vmatprep.subr.mxu0 0.0
    %103 = vmatpush1.msra.mxu0 0.0
    %104 = vmatprep.subr.mxu0 0.0
    %105 = vmatpush1.msra.mxu0 0.0
    %106 = vmatprep.subr.mxu0 0.0
    %107 = vmatpush1.msra.mxu0 0.0
    %108 = vmatprep.subr.mxu0 0.0
    %109 = vmatpush1.msra.mxu0 0.0
    %110 = vmatprep.subr.mxu0 0.0
    %111 = vmatpush1.msra.mxu0 0.0
    %112 = vmatprep.subr.mxu0 0.0
    %113 = vmatpush1.msra.mxu0 0.0
    %114 = vmatprep.subr.mxu0 0.0
    %115 = vmatpush1.msra.mxu0 0.0
    %116 = vmatprep.subr.mxu0 0.0
    %117 = vmatpush1.msra.mxu0 0.0
    %118 = vmatprep.subr.mxu0 0.0
    %119 = vmatpush1.msra.mxu0 0.0
    %120 = vmatprep.subr.mxu0 0.0
    %121 = vmatpush1.msra.mxu0 0.0
    %122 = vmatprep.subr.mxu0 0.0
    %123 = vmatpush1.msra.mxu0 0.0
    %124 = vmatprep.subr.mxu0 0.0
    %125 = vmatpush1.msra.mxu0 0.0
    %126 = vmatprep.subr.mxu0 0.0
    %127 = vmatpush1.msra.mxu0 0.0
    %128 = vmatprep.subr.mxu0 0.0
    %129 = vmatpush1.msra.mxu0 0.0
    %130 = vmatprep.subr.mxu0 0.0
    %131 = vmatpush1.msra.mxu0 0.0
    %132 = vmatprep.subr.mxu0 0.0
    %133 = vmatpush1.msra.mxu0 0.0
    %134 = vmatprep.subr.mxu0 0.0
    %135 = vmatpush1.msra.mxu0 0.0
    %136 = vmatprep.mubr.f32.mxu0 0.0
    %137 = vmatmul.mubr.f32.gmra.mrb[0].mxu0 %v43
    %v138 = vpop.f32.mrb[0].mxu0
    %v139 = vadd.f32 0.0, %v138
    %v140 = vpop.f32.mrb[0].mxu0
    %141 = vmatprep.mubr.f32.mxu0 0.0
    %142 = vmatmul.mubr.f32.gmra.mrb[0].mxu0 %v46
    %v143 = vpop.f32.mrb[0].mxu0
    %v144 = vadd.f32 0.0, %v143
    %v145 = vpop.f32.mrb[0].mxu0
    %146 = vmatprep.mubr.f32.mxu0 0.0
    %147 = vmatmul.mubr.f32.gmra.mrb[0].mxu0 %v49
    %v148 = vpop.f32.mrb[0].mxu0
    %v149 = vadd.f32 0.0, %v148
    %v150 = vpop.f32.mrb[0].mxu0
    %151 = vmatprep.mubr.f32.mxu0 0.0
    %152 = vmatmul.mubr.f32.gmra.mrb[0].mxu0 %v52
    %v153 = vpop.f32.mrb[0].mxu0
    %v154 = vadd.f32 0.0, %v153
    %v155 = vpop.f32.mrb[0].mxu0
    %156 = vmatprep.mubr.f32.mxu0 0.0
    %157 = vmatmul.mubr.f32.gmra.mrb[0].mxu0 %v55
    %v158 = vpop.f32.mrb[0].mxu0
    %v159 = vadd.f32 0.0, %v158
    %v160 = vpop.f32.mrb[0].mxu0
    %161 = vmatprep.mubr.f32.mxu0 0.0
    %162 = vmatmul.mubr.f32.gmra.mrb[0].mxu0 %v58
    %v163 = vpop.f32.mrb[0].mxu0
    %v164 = vadd.f32 0.0, %v163
    %v165 = vpop.f32.mrb[0].mxu0
    %166 = vmatprep.mubr.f32.mxu0 0.0
    %167 = vmatmul.mubr.f32.gmra.mrb[0].mxu0 %v61
    %v168 = vpop.f32.mrb[0].mxu0
    %v169 = vadd.f32 0.0, %v168
    %v170 = vpop.f32.mrb[0].mxu0
    %171 = vmatprep.mubr.f32.mxu0 0.0
    %172 = vmatmul.mubr.f32.gmra.mrb[0].mxu0 %v64
    %v173 = vpop.f32.mrb[0].mxu0
    %v174 = vadd.f32 0.0, %v173
    %v175 = vpop.f32.mrb[0].mxu0
    %176 = vmatprep.mubr.f32.mxu0 0.0
    %177 = vmatmul.mubr.f32.gmra.mrb[0].mxu0 %v67
    %v178 = vpop.f32.mrb[0].mxu0
    %v179 = vadd.f32 0.0, %v178
    %v180 = vpop.f32.mrb[0].mxu0
    %181 = vmatprep.mubr.f32.mxu0 0.0
    %182 = vmatmul.mubr.f32.gmra.mrb[0].mxu0 %v70
    %v183 = vpop.f32.mrb[0].mxu0
    %v184 = vadd.f32 0.0, %v183
    %v185 = vpop.f32.mrb[0].mxu0
    %186 = vdwg.mxu0
    %v187 = vld [vmem:[%s2] sm:$0xff]
    %v189 = vsel %vm41, %v187, 0
    %191 = vmatprep.subr.mxu0 0.0
    %192 = vmatpush1.msra.mxu0 %v139
    %193 = vmatprep.subr.mxu0 0.0
    %194 = vmatpush1.msra.mxu0 %v144
    %195 = vmatprep.subr.mxu0 0.0
    %196 = vmatpush1.msra.mxu0 0.0
    %197 = vmatprep.subr.mxu0 0.0
    %198 = vmatpush1.msra.mxu0 0.0
    %199 = vmatprep.subr.mxu0 0.0
    %200 = vmatpush1.msra.mxu0 0.0
    %201 = vmatprep.subr.mxu0 0.0
    %202 = vmatpush1.msra.mxu0 0.0
    %203 = vmatprep.subr.mxu0 0.0
    %204 = vmatpush1.msra.mxu0 0.0
    %205 = vmatprep.subr.mxu0 0.0
    %206 = vmatpush1.msra.mxu0 0.0
    %207 = vmatprep.subr.mxu0 0.0
    %208 = vmatpush1.msra.mxu0 0.0
    %209 = vmatprep.subr.mxu0 0.0
    %210 = vmatpush1.msra.mxu0 0.0
    %211 = vmatprep.subr.mxu0 0.0
    %212 = vmatpush1.msra.mxu0 0.0
    %213 = vmatprep.subr.mxu0 0.0
    %214 = vmatpush1.msra.mxu0 0.0
    %215 = vmatprep.subr.mxu0 0.0
    %216 = vmatpush1.msra.mxu0 0.0
    %217 = vmatprep.subr.mxu0 0.0
    %218 = vmatpush1.msra.mxu0 0.0
    %219 = vmatprep.subr.mxu0 0.0
    %220 = vmatpush1.msra.mxu0 0.0
    %221 = vmatprep.subr.mxu0 0.0
    %222 = vmatpush1.msra.mxu0 0.0
    %223 = vmatprep.subr.mxu0 0.0
    %224 = vmatpush1.msra.mxu0 0.0
    %225 = vmatprep.subr.mxu0 0.0
    %226 = vmatpush1.msra.mxu0 0.0
    %227 = vmatprep.subr.mxu0 0.0
    %228 = vmatpush1.msra.mxu0 0.0
    %229 = vmatprep.subr.mxu0 0.0
    %230 = vmatpush1.msra.mxu0 0.0
    %231 = vmatprep.subr.mxu0 0.0
    %232 = vmatpush1.msra.mxu0 0.0
    %233 = vmatprep.subr.mxu0 0.0
    %234 = vmatpush1.msra.mxu0 0.0
    %235 = vmatprep.subr.mxu0 0.0
    %236 = vmatpush1.msra.mxu0 0.0
    %237 = vmatprep.subr.mxu0 0.0
    %238 = vmatpush1.msra.mxu0 0.0
    %239 = vmatprep.subr.mxu0 0.0
    %240 = vmatpush1.msra.mxu0 0.0
    %241 = vmatprep.subr.mxu0 0.0
    %242 = vmatpush1.msra.mxu0 0.0
    %243 = vmatprep.subr.mxu0 0.0
    %244 = vmatpush1.msra.mxu0 0.0
    %245 = vmatprep.subr.mxu0 0.0
    %246 = vmatpush1.msra.mxu0 0.0
    %247 = vmatprep.subr.mxu0 0.0
    %248 = vmatpush1.msra.mxu0 0.0
    %249 = vmatprep.subr.mxu0 0.0
    %250 = vmatpush1.msra.mxu0 0.0
    %251 = vmatprep.subr.mxu0 0.0
    %252 = vmatpush1.msra.mxu0 0.0
    %253 = vmatprep.subr.mxu0 0.0
    %254 = vmatpush1.msra.mxu0 0.0
    %255 = vmatprep.mubr.f32.mxu0 0.0
    %256 = vmatmul.mubr.f32.gmra.mrb[0].mxu0 %v189
    %v257 = vpop.f32.mrb[0].mxu0
    %v258 = vadd.f32 0.0, %v257
    %v259 = vpop.f32.mrb[0].mxu0
    %260 = vdwg.mxu0
    %261 = vmatprep.subr.mxu0 0.0
    %262 = vmatpush1.msra.mxu0 %v149
    %263 = vmatprep.subr.mxu0 0.0
    %264 = vmatpush1.msra.mxu0 %v154
    %265 = vmatprep.subr.mxu0 0.0
    %266 = vmatpush1.msra.mxu0 0.0
    %267 = vmatprep.subr.mxu0 0.0
    %268 = vmatpush1.msra.mxu0 0.0
    %269 = vmatprep.subr.mxu0 0.0
    %270 = vmatpush1.msra.mxu0 0.0
    %271 = vmatprep.subr.mxu0 0.0
    %272 = vmatpush1.msra.mxu0 0.0
    %273 = vmatprep.subr.mxu0 0.0
    %274 = vmatpush1.msra.mxu0 0.0
    %275 = vmatprep.subr.mxu0 0.0
    %276 = vmatpush1.msra.mxu0 0.0
    %277 = vmatprep.subr.mxu0 0.0
    %278 = vmatpush1.msra.mxu0 0.0
    %279 = vmatprep.subr.mxu0 0.0
    %280 = vmatpush1.msra.mxu0 0.0
    %281 = vmatprep.subr.mxu0 0.0
    %282 = vmatpush1.msra.mxu0 0.0
    %283 = vmatprep.subr.mxu0 0.0
    %284 = vmatpush1.msra.mxu0 0.0
    %285 = vmatprep.subr.mxu0 0.0
    %286 = vmatpush1.msra.mxu0 0.0
    %287 = vmatprep.subr.mxu0 0.0
    %288 = vmatpush1.msra.mxu0 0.0
    %289 = vmatprep.subr.mxu0 0.0
    %290 = vmatpush1.msra.mxu0 0.0
    %291 = vmatprep.subr.mxu0 0.0
    %292 = vmatpush1.msra.mxu0 0.0
    %293 = vmatprep.subr.mxu0 0.0
    %294 = vmatpush1.msra.mxu0 0.0
    %295 = vmatprep.subr.mxu0 0.0
    %296 = vmatpush1.msra.mxu0 0.0
    %297 = vmatprep.subr.mxu0 0.0
    %298 = vmatpush1.msra.mxu0 0.0
    %299 = vmatprep.subr.mxu0 0.0
    %300 = vmatpush1.msra.mxu0 0.0
    %301 = vmatprep.subr.mxu0 0.0
    %302 = vmatpush1.msra.mxu0 0.0
    %303 = vmatprep.subr.mxu0 0.0
    %304 = vmatpush1.msra.mxu0 0.0
    %305 = vmatprep.subr.mxu0 0.0
    %306 = vmatpush1.msra.mxu0 0.0
    %307 = vmatprep.subr.mxu0 0.0
    %308 = vmatpush1.msra.mxu0 0.0
    %309 = vmatprep.subr.mxu0 0.0
    %310 = vmatpush1.msra.mxu0 0.0
    %311 = vmatprep.subr.mxu0 0.0
    %312 = vmatpush1.msra.mxu0 0.0
    %313 = vmatprep.subr.mxu0 0.0
    %314 = vmatpush1.msra.mxu0 0.0
    %315 = vmatprep.subr.mxu0 0.0
    %316 = vmatpush1.msra.mxu0 0.0
    %317 = vmatprep.subr.mxu0 0.0
    %318 = vmatpush1.msra.mxu0 0.0
    %319 = vmatprep.subr.mxu0 0.0
    %320 = vmatpush1.msra.mxu0 0.0
    %321 = vmatprep.subr.mxu0 0.0
    %322 = vmatpush1.msra.mxu0 0.0
    %323 = vmatprep.subr.mxu0 0.0
    %324 = vmatpush1.msra.mxu0 0.0
    %325 = vmatprep.mubr.f32.mxu0 0.0
    %326 = vmatmul.mubr.f32.gmra.mrb[0].mxu0 %v189
    %v327 = vpop.f32.mrb[0].mxu0
    %v328 = vadd.f32 0.0, %v327
    %v329 = vpop.f32.mrb[0].mxu0
    %330 = vdwg.mxu0
    %331 = vmatprep.subr.mxu0 0.0
    %332 = vmatpush1.msra.mxu0 %v159
    %333 = vmatprep.subr.mxu0 0.0
    %334 = vmatpush1.msra.mxu0 %v164
    %335 = vmatprep.subr.mxu0 0.0
    %336 = vmatpush1.msra.mxu0 0.0
    %337 = vmatprep.subr.mxu0 0.0
    %338 = vmatpush1.msra.mxu0 0.0
    %339 = vmatprep.subr.mxu0 0.0
    %340 = vmatpush1.msra.mxu0 0.0
    %341 = vmatprep.subr.mxu0 0.0
    %342 = vmatpush1.msra.mxu0 0.0
    %343 = vmatprep.subr.mxu0 0.0
    %344 = vmatpush1.msra.mxu0 0.0
    %345 = vmatprep.subr.mxu0 0.0
    %346 = vmatpush1.msra.mxu0 0.0
    %347 = vmatprep.subr.mxu0 0.0
    %348 = vmatpush1.msra.mxu0 0.0
    %349 = vmatprep.subr.mxu0 0.0
    %350 = vmatpush1.msra.mxu0 0.0
    %351 = vmatprep.subr.mxu0 0.0
    %352 = vmatpush1.msra.mxu0 0.0
    %353 = vmatprep.subr.mxu0 0.0
    %354 = vmatpush1.msra.mxu0 0.0
    %355 = vmatprep.subr.mxu0 0.0
    %356 = vmatpush1.msra.mxu0 0.0
    %357 = vmatprep.subr.mxu0 0.0
    %358 = vmatpush1.msra.mxu0 0.0
    %359 = vmatprep.subr.mxu0 0.0
    %360 = vmatpush1.msra.mxu0 0.0
    %361 = vmatprep.subr.mxu0 0.0
    %362 = vmatpush1.msra.mxu0 0.0
    %363 = vmatprep.subr.mxu0 0.0
    %364 = vmatpush1.msra.mxu0 0.0
    %365 = vmatprep.subr.mxu0 0.0
    %366 = vmatpush1.msra.mxu0 0.0
    %367 = vmatprep.subr.mxu0 0.0
    %368 = vmatpush1.msra.mxu0 0.0
    %369 = vmatprep.subr.mxu0 0.0
    %370 = vmatpush1.msra.mxu0 0.0
    %371 = vmatprep.subr.mxu0 0.0
    %372 = vmatpush1.msra.mxu0 0.0
    %373 = vmatprep.subr.mxu0 0.0
    %374 = vmatpush1.msra.mxu0 0.0
    %375 = vmatprep.subr.mxu0 0.0
    %376 = vmatpush1.msra.mxu0 0.0
    %377 = vmatprep.subr.mxu0 0.0
    %378 = vmatpush1.msra.mxu0 0.0
    %379 = vmatprep.subr.mxu0 0.0
    %380 = vmatpush1.msra.mxu0 0.0
    %381 = vmatprep.subr.mxu0 0.0
    %382 = vmatpush1.msra.mxu0 0.0
    %383 = vmatprep.subr.mxu0 0.0
    %384 = vmatpush1.msra.mxu0 0.0
    %385 = vmatprep.subr.mxu0 0.0
    %386 = vmatpush1.msra.mxu0 0.0
    %387 = vmatprep.subr.mxu0 0.0
    %388 = vmatpush1.msra.mxu0 0.0
    %389 = vmatprep.subr.mxu0 0.0
    %390 = vmatpush1.msra.mxu0 0.0
    %391 = vmatprep.subr.mxu0 0.0
    %392 = vmatpush1.msra.mxu0 0.0
    %393 = vmatprep.subr.mxu0 0.0
    %394 = vmatpush1.msra.mxu0 0.0
    %395 = vmatprep.mubr.f32.mxu0 0.0
    %396 = vmatmul.mubr.f32.gmra.mrb[0].mxu0 %v189
    %v397 = vpop.f32.mrb[0].mxu0
    %v398 = vadd.f32 0.0, %v397
    %v399 = vpop.f32.mrb[0].mxu0
    %400 = vdwg.mxu0
    %401 = vmatprep.subr.mxu0 0.0
    %402 = vmatpush1.msra.mxu0 %v169
    %403 = vmatprep.subr.mxu0 0.0
    %404 = vmatpush1.msra.mxu0 %v174
    %405 = vmatprep.subr.mxu0 0.0
    %406 = vmatpush1.msra.mxu0 0.0
    %407 = vmatprep.subr.mxu0 0.0
    %408 = vmatpush1.msra.mxu0 0.0
    %409 = vmatprep.subr.mxu0 0.0
    %410 = vmatpush1.msra.mxu0 0.0
    %411 = vmatprep.subr.mxu0 0.0
    %412 = vmatpush1.msra.mxu0 0.0
    %413 = vmatprep.subr.mxu0 0.0
    %414 = vmatpush1.msra.mxu0 0.0
    %415 = vmatprep.subr.mxu0 0.0
    %416 = vmatpush1.msra.mxu0 0.0
    %417 = vmatprep.subr.mxu0 0.0
    %418 = vmatpush1.msra.mxu0 0.0
    %419 = vmatprep.subr.mxu0 0.0
    %420 = vmatpush1.msra.mxu0 0.0
    %421 = vmatprep.subr.mxu0 0.0
    %422 = vmatpush1.msra.mxu0 0.0
    %423 = vmatprep.subr.mxu0 0.0
    %424 = vmatpush1.msra.mxu0 0.0
    %425 = vmatprep.subr.mxu0 0.0
    %426 = vmatpush1.msra.mxu0 0.0
    %427 = vmatprep.subr.mxu0 0.0
    %428 = vmatpush1.msra.mxu0 0.0
    %429 = vmatprep.subr.mxu0 0.0
    %430 = vmatpush1.msra.mxu0 0.0
    %431 = vmatprep.subr.mxu0 0.0
    %432 = vmatpush1.msra.mxu0 0.0
    %433 = vmatprep.subr.mxu0 0.0
    %434 = vmatpush1.msra.mxu0 0.0
    %435 = vmatprep.subr.mxu0 0.0
    %436 = vmatpush1.msra.mxu0 0.0
    %437 = vmatprep.subr.mxu0 0.0
    %438 = vmatpush1.msra.mxu0 0.0
    %439 = vmatprep.subr.mxu0 0.0
    %440 = vmatpush1.msra.mxu0 0.0
    %441 = vmatprep.subr.mxu0 0.0
    %442 = vmatpush1.msra.mxu0 0.0
    %443 = vmatprep.subr.mxu0 0.0
    %444 = vmatpush1.msra.mxu0 0.0
    %445 = vmatprep.subr.mxu0 0.0
    %446 = vmatpush1.msra.mxu0 0.0
    %447 = vmatprep.subr.mxu0 0.0
    %448 = vmatpush1.msra.mxu0 0.0
    %449 = vmatprep.subr.mxu0 0.0
    %450 = vmatpush1.msra.mxu0 0.0
    %451 = vmatprep.subr.mxu0 0.0
    %452 = vmatpush1.msra.mxu0 0.0
    %453 = vmatprep.subr.mxu0 0.0
    %454 = vmatpush1.msra.mxu0 0.0
    %455 = vmatprep.subr.mxu0 0.0
    %456 = vmatpush1.msra.mxu0 0.0
    %457 = vmatprep.subr.mxu0 0.0
    %458 = vmatpush1.msra.mxu0 0.0
    %459 = vmatprep.subr.mxu0 0.0
    %460 = vmatpush1.msra.mxu0 0.0
    %461 = vmatprep.subr.mxu0 0.0
    %462 = vmatpush1.msra.mxu0 0.0
    %463 = vmatprep.subr.mxu0 0.0
    %464 = vmatpush1.msra.mxu0 0.0
    %465 = vmatprep.mubr.f32.mxu0 0.0
    %466 = vmatmul.mubr.f32.gmra.mrb[0].mxu0 %v189
    %v467 = vpop.f32.mrb[0].mxu0
    %v468 = vadd.f32 0.0, %v467
    %v469 = vpop.f32.mrb[0].mxu0
    %470 = vdwg.mxu0
    %471 = vmatprep.subr.mxu0 0.0
    %472 = vmatpush1.msra.mxu0 %v179
    %473 = vmatprep.subr.mxu0 0.0
    %474 = vmatpush1.msra.mxu0 %v184
    %475 = vmatprep.subr.mxu0 0.0
    %476 = vmatpush1.msra.mxu0 0.0
    %477 = vmatprep.subr.mxu0 0.0
    %478 = vmatpush1.msra.mxu0 0.0
    %479 = vmatprep.subr.mxu0 0.0
    %480 = vmatpush1.msra.mxu0 0.0
    %481 = vmatprep.subr.mxu0 0.0
    %482 = vmatpush1.msra.mxu0 0.0
    %483 = vmatprep.subr.mxu0 0.0
    %484 = vmatpush1.msra.mxu0 0.0
    %485 = vmatprep.subr.mxu0 0.0
    %486 = vmatpush1.msra.mxu0 0.0
    %487 = vmatprep.subr.mxu0 0.0
    %488 = vmatpush1.msra.mxu0 0.0
    %489 = vmatprep.subr.mxu0 0.0
    %490 = vmatpush1.msra.mxu0 0.0
    %491 = vmatprep.subr.mxu0 0.0
    %492 = vmatpush1.msra.mxu0 0.0
    %493 = vmatprep.subr.mxu0 0.0
    %494 = vmatpush1.msra.mxu0 0.0
    %495 = vmatprep.subr.mxu0 0.0
    %496 = vmatpush1.msra.mxu0 0.0
    %497 = vmatprep.subr.mxu0 0.0
    %498 = vmatpush1.msra.mxu0 0.0
    %499 = vmatprep.subr.mxu0 0.0
    %500 = vmatpush1.msra.mxu0 0.0
    %501 = vmatprep.subr.mxu0 0.0
    %502 = vmatpush1.msra.mxu0 0.0
    %503 = vmatprep.subr.mxu0 0.0
    %504 = vmatpush1.msra.mxu0 0.0
    %505 = vmatprep.subr.mxu0 0.0
    %506 = vmatpush1.msra.mxu0 0.0
    %507 = vmatprep.subr.mxu0 0.0
    %508 = vmatpush1.msra.mxu0 0.0
    %509 = vmatprep.subr.mxu0 0.0
    %510 = vmatpush1.msra.mxu0 0.0
    %511 = vmatprep.subr.mxu0 0.0
    %512 = vmatpush1.msra.mxu0 0.0
    %513 = vmatprep.subr.mxu0 0.0
    %514 = vmatpush1.msra.mxu0 0.0
    %515 = vmatprep.subr.mxu0 0.0
    %516 = vmatpush1.msra.mxu0 0.0
    %517 = vmatprep.subr.mxu0 0.0
    %518 = vmatpush1.msra.mxu0 0.0
    %519 = vmatprep.subr.mxu0 0.0
    %520 = vmatpush1.msra.mxu0 0.0
    %521 = vmatprep.subr.mxu0 0.0
    %522 = vmatpush1.msra.mxu0 0.0
    %523 = vmatprep.subr.mxu0 0.0
    %524 = vmatpush1.msra.mxu0 0.0
    %525 = vmatprep.subr.mxu0 0.0
    %526 = vmatpush1.msra.mxu0 0.0
    %527 = vmatprep.subr.mxu0 0.0
    %528 = vmatpush1.msra.mxu0 0.0
    %529 = vmatprep.subr.mxu0 0.0
    %530 = vmatpush1.msra.mxu0 0.0
    %531 = vmatprep.subr.mxu0 0.0
    %532 = vmatpush1.msra.mxu0 0.0
    %533 = vmatprep.subr.mxu0 0.0
    %534 = vmatpush1.msra.mxu0 0.0
    %535 = vmatprep.mubr.f32.mxu0 0.0
    %536 = vmatmul.mubr.f32.gmra.mrb[0].mxu0 %v189
    %v537 = vpop.f32.mrb[0].mxu0
    %v538 = vadd.f32 0.0, %v537
    %v539 = vpop.f32.mrb[0].mxu0
    %540 = vdwg.mxu0
    %vm541 = vcmask 64512
    %542 = vst.msk [vmem:[#allocation5] sm:$0xff] %vm541, %v258
    %543 = vst.msk [vmem:[#allocation5 + $0x8] sm:$0xff] %vm541, %v328
    %544 = vst.msk [vmem:[#allocation5 + $0x10] sm:$0xff] %vm541, %v398
    %545 = vst.msk [vmem:[#allocation5 + $0x18] sm:$0xff] %vm541, %v468
    %546 = vst.msk [vmem:[#allocation5 + $0x20] sm:$0xff] %vm541, %v538
    // Predicated region
    $region18: #{spd_bimap.1} parent=1 // pred_check
      _
    $region19: #{spd_bimap.1} parent=1 // pred_check_branch
      %548 = sbr.rel (0) target = $region21
    $region20: #{spd_bimap.1} parent=1 // pred_region
      %s550 = ssub.s32 640, 640
      %551 = vsyncadd [#allocation4], %s550
      %s552 = sshll.u32 [#allocation5], 4
      %s553 = int_to_ptr.vmem [resolvable:$true] %s552
      %558 = dma.vmem_to_hbm [thread:$0]  %s553, 640, %s3, [#allocation4], 128, 128, 8
    $region21: #{spd_bimap.1} parent=1 // pred_fallthru
      _
    // Predicated region
    $region22: #{spd_bimap.1} parent=1 // pred_check
      _
    $region23: #{spd_bimap.1} parent=1 // pred_check_branch
      %560 = sbr.rel (0) target = $region25
    $region24: #{spd_bimap.1} parent=1 // pred_region
      %561 = dma.done [#allocation4], 640
    $region25: #{spd_bimap.1} parent=1 // pred_fallthru
      _
    %562 = vsyncpa [#allocation3], 1
    %563 = vsyncpa [#allocation4], 1

</llo_original>
